<compile_context>
chip_gen: v6e
topology: v6e:2x2x1
jax: 0.10.0
libtpu: 0.0.40
codegen_flags: <defaults>
</compile_context>

<pallas_src>
import functools

import jax
import jax.numpy as jnp
from jax.experimental import pallas as pl
from jax.experimental.pallas import tpu as pltpu

LANE = 128          # pad feature dims to lane width
NEG_BIG = -1e30     # "minus infinity" bias for padded output lanes (keep in f32!)


def _round_up(n: int, m: int) -> int:
    return ((n + m - 1) // m) * m


def _max_tile_b() -> int:
    """Batch-tile cap: 512 (v6e/v7x amortization) / 256 on v5e (single vst slot)."""
    try:
        kind = jax.devices()[0].device_kind.lower()
    except Exception:  # pragma: no cover - non-TPU fallback
        kind = ""
    if "v5e" in kind or "v5 lite" in kind or "v5lite" in kind:
        return 256
    return 512


def _pick_tile_b(B: int) -> int:
    """Pick the batch tile. For B > 8 guarantee >= 2 grid steps (v7x dual-TC)."""
    if B <= 8:
        return B  # one tiny block; nothing to split across cores anyway
    half = _round_up(pl.cdiv(B, 2), 8)
    return min(_max_tile_b(), half)


def mlp_softmax_kernel(x_ref, w1_ref, b1_ref, w2_ref, b2_ref, w3_ref, b3_ref,
                       o_ref, *, num_out):
    """One batch tile: 3 fused Linear layers + ReLU + row softmax, all in VMEM.

    Weights arrive pre-transposed as (in_pad, out_pad) bf16; contractions are
    plain `x @ W` (MXU-native).  Accumulation and all elementwise math are f32.
    """
    x = x_ref[...].astype(jnp.bfloat16)

    h1 = jnp.dot(x, w1_ref[...], preferred_element_type=jnp.float32)
    h1 = jnp.maximum(h1 + b1_ref[...], 0.0)

    h2 = jnp.dot(h1.astype(jnp.bfloat16), w2_ref[...],
                 preferred_element_type=jnp.float32)
    h2 = jnp.maximum(h2 + b2_ref[...], 0.0)

    logits = jnp.dot(h2.astype(jnp.bfloat16), w3_ref[...],
                     preferred_element_type=jnp.float32)
    logits = logits + b3_ref[...]

    # Numerically stable softmax over dim=1 (f32).  Padded lanes carry bias=-1e30
    # so their exp underflows to 0 and does not perturb the real columns.
    m = jnp.max(logits, axis=1, keepdims=True)
    e = jnp.exp(logits - m)
    s = jnp.sum(e, axis=1, keepdims=True)
    probs = e * pl.reciprocal(s, approx=True)

    # Only the real output columns go back to HBM (masked store, 16x fewer bytes
    # than the padded slab + no wrapper-side slice pass).
    o_ref[...] = probs[:, :num_out]


def prepare_params(w1, b1, w2, b2, w3, b3):
    """One-time parameter prep (outside the per-call forward path).

    Pre-transposes PyTorch (out, in) weights to (in, out_pad) bf16 so the kernel
    contraction is MXU-native, zero-pads hidden/output feature dims to 128 lanes,
    and sets padded output-lane biases to -1e30 (f32) so softmax ignores them.
    """
    num_hidden, num_in = w1.shape
    num_out = w3.shape[0]
    h_pad = _round_up(num_hidden, LANE)
    o_pad = _round_up(num_out, LANE)

    bf16 = jnp.bfloat16
    w1p = jnp.zeros((num_in, h_pad), bf16).at[:, :num_hidden].set(w1.T.astype(bf16))
    b1p = jnp.zeros((1, h_pad), jnp.float32).at[0, :num_hidden].set(b1)

    w2p = (jnp.zeros((h_pad, h_pad), bf16)
           .at[:num_hidden, :num_hidden].set(w2.T.astype(bf16)))
    b2p = jnp.zeros((1, h_pad), jnp.float32).at[0, :num_hidden].set(b2)

    w3p = (jnp.zeros((h_pad, o_pad), bf16)
           .at[:num_hidden, :num_out].set(w3.T.astype(bf16)))
    b3p = jnp.full((1, o_pad), NEG_BIG, jnp.float32).at[0, :num_out].set(b3)

    return (w1p, b1p, w2p, b2p, w3p, b3p), num_out


@functools.partial(jax.jit, static_argnames=("num_out",))
def softmax_deeplift_forward(x, params, *, num_out):
    """x: (B, num_in) f32. params: output of prepare_params. Returns (B, num_out) f32."""
    w1p, b1p, w2p, b2p, w3p, b3p = params
    B, num_in = x.shape
    h_pad = w1p.shape[1]
    o_pad = w3p.shape[1]

    tile_b = _pick_tile_b(B)
    grid = (pl.cdiv(B, tile_b),)

    # Advisory cost for XLA's scheduler around the custom call.
    flops = 2 * B * (num_in * h_pad + h_pad * h_pad + h_pad * o_pad)
    transcendentals = B * (o_pad + 1)  # exp over padded logits + approx reciprocal
    bytes_accessed = (x.size * 4
                      + (w1p.size + w2p.size + w3p.size) * 2   # bf16 weights
                      + (b1p.size + b2p.size + b3p.size) * 4   # f32 biases
                      + B * num_out * 4)                       # f32 output
    cost = pl.CostEstimate(flops=flops, transcendentals=transcendentals,
                           bytes_accessed=bytes_accessed)

    vmem = pltpu.MemorySpace.VMEM
    kernel = functools.partial(mlp_softmax_kernel, num_out=num_out)

    out = pl.pallas_call(
        kernel,
        out_shape=jax.ShapeDtypeStruct((B, num_out), jnp.float32),
        grid_spec=pltpu.PrefetchScalarGridSpec(
            num_scalar_prefetch=0,
            grid=grid,
            in_specs=[
                # x: streamed per batch tile.
                pl.BlockSpec((tile_b, num_in), lambda i: (i, 0), memory_space=vmem),
                # Weights/biases: constant index_map -> resident in VMEM across tiles.
                pl.BlockSpec((num_in, h_pad), lambda i: (0, 0), memory_space=vmem),
                pl.BlockSpec((1, h_pad), lambda i: (0, 0), memory_space=vmem),
                pl.BlockSpec((h_pad, h_pad), lambda i: (0, 0), memory_space=vmem),
                pl.BlockSpec((1, h_pad), lambda i: (0, 0), memory_space=vmem),
                pl.BlockSpec((h_pad, o_pad), lambda i: (0, 0), memory_space=vmem),
                pl.BlockSpec((1, o_pad), lambda i: (0, 0), memory_space=vmem),
            ],
            # Block last dim == full array dim (num_out), so the non-128 width is legal.
            out_specs=pl.BlockSpec((tile_b, num_out), lambda i: (i, 0),
                                   memory_space=vmem),
        ),
        compiler_params=pltpu.CompilerParams(dimension_semantics=("parallel",)),
        cost_estimate=cost,
    )(x, w1p, b1p, w2p, b2p, w3p, b3p)
    return out


if __name__ == "__main__":
    # Small shapes consistent with SoftmaxDeepLiftModel(num_in, num_hidden, num_out).
    batch, num_in, num_hidden, num_out = 2, 32, 32, 8

    key = jax.random.PRNGKey(0)
    kx, kb1, kb2, kb3 = jax.random.split(key, 4)

    x = jax.random.normal(kx, (batch, num_in), dtype=jnp.float32)

    # Module sets all Linear weights to ones; biases keep a default-style init.
    w1 = jnp.ones((num_hidden, num_in), dtype=jnp.float32)
    w2 = jnp.ones((num_hidden, num_hidden), dtype=jnp.float32)
    w3 = jnp.ones((num_out, num_hidden), dtype=jnp.float32)
    b1 = jax.random.uniform(kb1, (num_hidden,), dtype=jnp.float32,
                            minval=-1.0 / num_in ** 0.5, maxval=1.0 / num_in ** 0.5)
    b2 = jax.random.uniform(kb2, (num_hidden,), dtype=jnp.float32,
                            minval=-1.0 / num_hidden ** 0.5, maxval=1.0 / num_hidden ** 0.5)
    b3 = jax.random.uniform(kb3, (num_out,), dtype=jnp.float32,
                            minval=-1.0 / num_hidden ** 0.5, maxval=1.0 / num_hidden ** 0.5)

    # One-time parameter prep (pad / transpose / bf16), then the fused forward.
    params, n_out = prepare_params(w1, b1, w2, b2, w3, b3)
    out = softmax_deeplift_forward(x, params, num_out=n_out)
    out = jax.block_until_ready(out)

    # Reference in plain JAX (same math as the PyTorch forward, f32, exact divide).
    h1 = jnp.maximum(x @ w1.T + b1, 0.0)
    h2 = jnp.maximum(h1 @ w2.T + b2, 0.0)
    logits = h2 @ w3.T + b3
    ref = jax.nn.softmax(logits, axis=1)

    assert out.shape == (batch, num_out)
    # bf16 MXU operands + approx reciprocal -> slightly looser tolerance than pure f32.
    assert jnp.allclose(out, ref, atol=5e-3, rtol=5e-3), (out, ref)
    assert jnp.allclose(jnp.sum(out, axis=1), 1.0, atol=5e-3)

    print("KERNEL_OK")
</pallas_src>

<mosaic_0001>
module attributes {stable_mosaic.version = 11 : i64} {
  func.func @mlp_softmax_kernel(%arg0: i32, %arg1: memref<2x32xf32, #tpu.memory_space<vmem>>, %arg2: memref<32x128xbf16, #tpu.memory_space<vmem>>, %arg3: memref<1x128xf32, #tpu.memory_space<vmem>>, %arg4: memref<128x128xbf16, #tpu.memory_space<vmem>>, %arg5: memref<1x128xf32, #tpu.memory_space<vmem>>, %arg6: memref<128x128xbf16, #tpu.memory_space<vmem>>, %arg7: memref<1x128xf32, #tpu.memory_space<vmem>>, %arg8: memref<2x8xf32, #tpu.memory_space<vmem>>) attributes {dimension_semantics = [#tpu.dimension_semantics<parallel>], iteration_bounds = array<i64: 1>, scalar_prefetch = 0 : i64, scratch_operands = 0 : i64, tpu.core_type = #tpu.core_type<tc>, window_params = [{transform_indices = @transform_0, window_bounds = array<i64: 2, 32>}, {pipeline_mode = #tpu.pipeline_mode<synchronous>, transform_indices = @transform_1, window_bounds = array<i64: 32, 128>}, {pipeline_mode = #tpu.pipeline_mode<synchronous>, transform_indices = @transform_2, window_bounds = array<i64: 1, 128>}, {pipeline_mode = #tpu.pipeline_mode<synchronous>, transform_indices = @transform_3, window_bounds = array<i64: 128, 128>}, {pipeline_mode = #tpu.pipeline_mode<synchronous>, transform_indices = @transform_4, window_bounds = array<i64: 1, 128>}, {pipeline_mode = #tpu.pipeline_mode<synchronous>, transform_indices = @transform_5, window_bounds = array<i64: 128, 128>}, {pipeline_mode = #tpu.pipeline_mode<synchronous>, transform_indices = @transform_6, window_bounds = array<i64: 1, 128>}, {transform_indices = @transform_7, window_bounds = array<i64: 2, 8>}]} {
    %c0 = arith.constant 0 : index
    %c0_0 = arith.constant 0 : index
    %0 = vector.load %arg1[%c0, %c0_0] : memref<2x32xf32, #tpu.memory_space<vmem>>, vector<2x32xf32>
    %1 = arith.truncf %0 : vector<2x32xf32> to vector<2x32xbf16>
    %c0_1 = arith.constant 0 : index
    %c0_2 = arith.constant 0 : index
    %2 = vector.load %arg2[%c0_1, %c0_2] : memref<32x128xbf16, #tpu.memory_space<vmem>>, vector<32x128xbf16>
    %cst = arith.constant dense<0.000000e+00> : vector<2x128xf32>
    %3 = tpu.matmul %1, %2, %cst {dimension_numbers = #tpu.dot_dimension_numbers<[1], [0], [0], [1], [0, 0, 1, 1], [], []>} : vector<2x32xbf16>, vector<32x128xbf16>, vector<2x128xf32> -> vector<2x128xf32>
    %c0_3 = arith.constant 0 : index
    %c0_4 = arith.constant 0 : index
    %4 = vector.load %arg3[%c0_3, %c0_4] : memref<1x128xf32, #tpu.memory_space<vmem>>, vector<1x128xf32>
    %5 = vector.broadcast %4 : vector<1x128xf32> to vector<2x128xf32>
    %6 = arith.addf %3, %5 : vector<2x128xf32>
    %cst_5 = arith.constant 0.000000e+00 : f32
    %7 = vector.broadcast %cst_5 : f32 to vector<2x128xf32>
    %8 = arith.maximumf %6, %7 : vector<2x128xf32>
    %9 = arith.truncf %8 : vector<2x128xf32> to vector<2x128xbf16>
    %c0_6 = arith.constant 0 : index
    %c0_7 = arith.constant 0 : index
    %10 = vector.load %arg4[%c0_6, %c0_7] : memref<128x128xbf16, #tpu.memory_space<vmem>>, vector<128x128xbf16>
    %cst_8 = arith.constant dense<0.000000e+00> : vector<2x128xf32>
    %11 = tpu.matmul %9, %10, %cst_8 {dimension_numbers = #tpu.dot_dimension_numbers<[1], [0], [0], [1], [0, 0, 1, 1], [], []>} : vector<2x128xbf16>, vector<128x128xbf16>, vector<2x128xf32> -> vector<2x128xf32>
    %c0_9 = arith.constant 0 : index
    %c0_10 = arith.constant 0 : index
    %12 = vector.load %arg5[%c0_9, %c0_10] : memref<1x128xf32, #tpu.memory_space<vmem>>, vector<1x128xf32>
    %13 = vector.broadcast %12 : vector<1x128xf32> to vector<2x128xf32>
    %14 = arith.addf %11, %13 : vector<2x128xf32>
    %cst_11 = arith.constant 0.000000e+00 : f32
    %15 = vector.broadcast %cst_11 : f32 to vector<2x128xf32>
    %16 = arith.maximumf %14, %15 : vector<2x128xf32>
    %17 = arith.truncf %16 : vector<2x128xf32> to vector<2x128xbf16>
    %c0_12 = arith.constant 0 : index
    %c0_13 = arith.constant 0 : index
    %18 = vector.load %arg6[%c0_12, %c0_13] : memref<128x128xbf16, #tpu.memory_space<vmem>>, vector<128x128xbf16>
    %cst_14 = arith.constant dense<0.000000e+00> : vector<2x128xf32>
    %19 = tpu.matmul %17, %18, %cst_14 {dimension_numbers = #tpu.dot_dimension_numbers<[1], [0], [0], [1], [0, 0, 1, 1], [], []>} : vector<2x128xbf16>, vector<128x128xbf16>, vector<2x128xf32> -> vector<2x128xf32>
    %c0_15 = arith.constant 0 : index
    %c0_16 = arith.constant 0 : index
    %20 = vector.load %arg7[%c0_15, %c0_16] : memref<1x128xf32, #tpu.memory_space<vmem>>, vector<1x128xf32>
    %21 = vector.broadcast %20 : vector<1x128xf32> to vector<2x128xf32>
    %22 = arith.addf %19, %21 : vector<2x128xf32>
    %cst_17 = arith.constant dense<0xFF800000> : vector<2xf32>
    %23 = vector.multi_reduction <maximumf>, %22, %cst_17 [1] : vector<2x128xf32> to vector<2xf32>
    %24 = vector.shape_cast %23 : vector<2xf32> to vector<2x1xf32>
    %25 = vector.broadcast %24 : vector<2x1xf32> to vector<2x128xf32>
    %26 = arith.subf %22, %25 : vector<2x128xf32>
    %27 = math.exp %26 : vector<2x128xf32>
    %cst_18 = arith.constant dense<0.000000e+00> : vector<2xf32>
    %28 = vector.multi_reduction <add>, %27, %cst_18 [1] : vector<2x128xf32> to vector<2xf32>
    %29 = vector.shape_cast %28 : vector<2xf32> to vector<2x1xf32>
    %30 = tpu.reciprocal %29 {approx = true} : vector<2x1xf32> -> vector<2x1xf32>
    %31 = vector.broadcast %30 : vector<2x1xf32> to vector<2x128xf32>
    %32 = arith.mulf %27, %31 : vector<2x128xf32>
    %33 = vector.extract_strided_slice %32 {offsets = [0, 0], sizes = [2, 8], strides = [1, 1]} : vector<2x128xf32> to vector<2x8xf32>
    %c0_19 = arith.constant 0 : index
    %c0_20 = arith.constant 0 : index
    %34 = vector.load %arg8[%c0_19, %c0_20] : memref<2x8xf32, #tpu.memory_space<vmem>>, vector<2x8xf32>
    tpu.vector_store %arg8[%c0_19, %c0_20], %33 {strides = array<i32>} : memref<2x8xf32, #tpu.memory_space<vmem>>, vector<2x8xf32>,
    return
  }
  func.func @transform_0(%arg0: i32) -> (i32, i32) {
    %c0_i32 = arith.constant 0 : i32
    %c0_i32_0 = arith.constant 0 : i32
    return %arg0, %c0_i32 : i32, i32
  }
  func.func @transform_1(%arg0: i32) -> (i32, i32) {
    %c0_i32 = arith.constant 0 : i32
    %c0_i32_0 = arith.constant 0 : i32
    %c0_i32_1 = arith.constant 0 : i32
    return %c0_i32, %c0_i32_0 : i32, i32
  }
  func.func @transform_2(%arg0: i32) -> (i32, i32) {
    %c0_i32 = arith.constant 0 : i32
    %c0_i32_0 = arith.constant 0 : i32
    %c0_i32_1 = arith.constant 0 : i32
    return %c0_i32, %c0_i32_0 : i32, i32
  }
  func.func @transform_3(%arg0: i32) -> (i32, i32) {
    %c0_i32 = arith.constant 0 : i32
    %c0_i32_0 = arith.constant 0 : i32
    %c0_i32_1 = arith.constant 0 : i32
    return %c0_i32, %c0_i32_0 : i32, i32
  }
  func.func @transform_4(%arg0: i32) -> (i32, i32) {
    %c0_i32 = arith.constant 0 : i32
    %c0_i32_0 = arith.constant 0 : i32
    %c0_i32_1 = arith.constant 0 : i32
    return %c0_i32, %c0_i32_0 : i32, i32
  }
  func.func @transform_5(%arg0: i32) -> (i32, i32) {
    %c0_i32 = arith.constant 0 : i32
    %c0_i32_0 = arith.constant 0 : i32
    %c0_i32_1 = arith.constant 0 : i32
    return %c0_i32, %c0_i32_0 : i32, i32
  }
  func.func @transform_6(%arg0: i32) -> (i32, i32) {
    %c0_i32 = arith.constant 0 : i32
    %c0_i32_0 = arith.constant 0 : i32
    %c0_i32_1 = arith.constant 0 : i32
    return %c0_i32, %c0_i32_0 : i32, i32
  }
  func.func @transform_7(%arg0: i32) -> (i32, i32) {
    %c0_i32 = arith.constant 0 : i32
    %c0_i32_0 = arith.constant 0 : i32
    return %arg0, %c0_i32 : i32, i32
  }
}

</mosaic_0001>

<llo_original>
// kernel: softmax_deeplift_forward.1
$region0: #{softmax_deeplift_forward.1}
  #allocation0 [shape = 'u32[]', space=smem, size = 0x4, offset = 0x4, fixed_abs, tag = 'smem constant byte address 0x4 - core index']
  #allocation1 [shape = 'u32[144,128]{1,0:T(1,128)}', space=vmem, size = 0x12000, scoped, tag = 'internal scratch']
  %s0 = inlined_call_operand.hbm [shape: f32[2,32], index: 0, kind: input, shape index: {}]
  %s1 = inlined_call_operand.hbm [shape: bf16[32,128], index: 1, kind: input, shape index: {}]
  %s2 = inlined_call_operand.vmem [shape: f32[1,128], index: 2, kind: input, shape index: {}]
  %s3 = inlined_call_operand.hbm [shape: bf16[128,128], index: 3, kind: input, shape index: {}]
  %s4 = inlined_call_operand.vmem [shape: f32[1,128], index: 4, kind: input, shape index: {}]
  %s5 = inlined_call_operand.hbm [shape: bf16[128,128], index: 5, kind: input, shape index: {}]
  %s6 = inlined_call_operand.vmem [shape: f32[1,128], index: 6, kind: input, shape index: {}]
  %s7 = inlined_call_operand.hbm [shape: f32[2,8], index: 7, kind: output, shape index: {}]
  %s8 = sld [smem:[#allocation0]]
  $region54: #{softmax_deeplift_forward.1} parent=0
    _
  %s10 = ssub.s32 1, %s8
  %s11 = scalar_select 0, %s10, %s8
  $region1: #{softmax_deeplift_forward.1} parent=0
    #allocation2 [shape = 'u8[1024]{0}', space=vmem, size = 0x400, scoped, tag = 'input window, operand 0, single buffered']
    #allocation3 [shape = 's32[1]{0}', space=sflag, size = 0x4, scoped, tag = 'scoped memory for softmax_deeplift_forward.1']
    #allocation4 [shape = 's32[1]{0}', space=sflag, size = 0x4, scoped, tag = 'scoped memory for softmax_deeplift_forward.1']
    #allocation5 [shape = 'u8[8192]{0}', space=vmem, size = 0x2000, scoped, tag = 'input window, operand 1, single buffered']
    #allocation6 [shape = 's32[1]{0}', space=sflag, size = 0x4, scoped, tag = 'scoped memory for softmax_deeplift_forward.1']
    #allocation7 [shape = 'u8[32768]{0}', space=vmem, size = 0x8000, scoped, tag = 'input window, operand 3, single buffered']
    #allocation8 [shape = 'u8[32768]{0}', space=vmem, size = 0x8000, scoped, tag = 'input window, operand 5, single buffered']
    #allocation9 [shape = 's32[1]{0}', space=sflag, size = 0x4, scoped, tag = 'scoped memory for softmax_deeplift_forward.1']
    #allocation10 [shape = 'u8[1024]{0}', space=vmem, size = 0x400, scoped, tag = 'output window, operand 0, single buffered']
    %12 = vsyncpa [#allocation3], 0
    %13 = vsyncpa [#allocation6], 0
    %14 = vsyncpa [#allocation9], 0
    %15 = vsyncpa [#allocation4], 0
    // Predicated region
    $region2: #{softmax_deeplift_forward.1} parent=1 // pred_check
      _
    $region3: #{softmax_deeplift_forward.1} parent=1 // pred_check_branch
      %17 = sbr.rel (0) target = $region5
    $region4: #{softmax_deeplift_forward.1} parent=1 // pred_region
      %s19 = ssub.s32 32, 32
      %20 = vsyncadd [#allocation3], %s19
      %s22 = sshll.u32 [#allocation2], 4
      %s23 = int_to_ptr.vmem [resolvable:$true] %s22
      %25 = dma.hbm_to_vmem [thread:$0]  %s0, 32, %s23, [#allocation3]
    $region5: #{softmax_deeplift_forward.1} parent=1 // pred_fallthru
      _
    // Predicated region
    $region6: #{softmax_deeplift_forward.1} parent=1 // pred_check
      _
    $region7: #{softmax_deeplift_forward.1} parent=1 // pred_check_branch
      %27 = sbr.rel (0) target = $region9
    $region8: #{softmax_deeplift_forward.1} parent=1 // pred_region
      %s29 = ssub.s32 256, 256
      %30 = vsyncadd [#allocation6], %s29
      %s31 = sshll.u32 [#allocation5], 4
      %s32 = int_to_ptr.vmem [resolvable:$true] %s31
      %37 = dma.hbm_to_vmem [thread:$0]  %s1, 256, %s32, [#allocation6], 64, 64, 4
    $region9: #{softmax_deeplift_forward.1} parent=1 // pred_fallthru
      _
    // Predicated region
    $region10: #{softmax_deeplift_forward.1} parent=1 // pred_check
      _
    $region11: #{softmax_deeplift_forward.1} parent=1 // pred_check_branch
      %39 = sbr.rel (0) target = $region13
    $region12: #{softmax_deeplift_forward.1} parent=1 // pred_region
      _
    $region13: #{softmax_deeplift_forward.1} parent=1 // pred_fallthru
      _
    // Predicated region
    $region14: #{softmax_deeplift_forward.1} parent=1 // pred_check
      _
    $region15: #{softmax_deeplift_forward.1} parent=1 // pred_check_branch
      %41 = sbr.rel (0) target = $region17
    $region16: #{softmax_deeplift_forward.1} parent=1 // pred_region
      %s43 = ssub.s32 1024, 1024
      %44 = vsyncadd [#allocation6], %s43
      %s45 = sshll.u32 [#allocation7], 4
      %s46 = int_to_ptr.vmem [resolvable:$true] %s45
      %51 = dma.hbm_to_vmem [thread:$0]  %s3, 1024, %s46, [#allocation6], 64, 64, 4
    $region17: #{softmax_deeplift_forward.1} parent=1 // pred_fallthru
      _
    // Predicated region
    $region18: #{softmax_deeplift_forward.1} parent=1 // pred_check
      _
    $region19: #{softmax_deeplift_forward.1} parent=1 // pred_check_branch
      %53 = sbr.rel (0) target = $region21
    $region20: #{softmax_deeplift_forward.1} parent=1 // pred_region
      _
    $region21: #{softmax_deeplift_forward.1} parent=1 // pred_fallthru
      _
    // Predicated region
    $region22: #{softmax_deeplift_forward.1} parent=1 // pred_check
      _
    $region23: #{softmax_deeplift_forward.1} parent=1 // pred_check_branch
      %55 = sbr.rel (0) target = $region25
    $region24: #{softmax_deeplift_forward.1} parent=1 // pred_region
      %s57 = ssub.s32 1024, 1024
      %58 = vsyncadd [#allocation9], %s57
      %s59 = sshll.u32 [#allocation8], 4
      %s60 = int_to_ptr.vmem [resolvable:$true] %s59
      %65 = dma.hbm_to_vmem [thread:$0]  %s5, 1024, %s60, [#allocation9], 64, 64, 4
    $region25: #{softmax_deeplift_forward.1} parent=1 // pred_fallthru
      _
    // Predicated region
    $region26: #{softmax_deeplift_forward.1} parent=1 // pred_check
      _
    $region27: #{softmax_deeplift_forward.1} parent=1 // pred_check_branch
      %67 = sbr.rel (0) target = $region29
    $region28: #{softmax_deeplift_forward.1} parent=1 // pred_region
      _
    $region29: #{softmax_deeplift_forward.1} parent=1 // pred_fallthru
      _
    // Predicated region
    $region30: #{softmax_deeplift_forward.1} parent=1 // pred_check
      _
    $region31: #{softmax_deeplift_forward.1} parent=1 // pred_check_branch
      %69 = sbr.rel (0) target = $region33
    $region32: #{softmax_deeplift_forward.1} parent=1 // pred_region
      %70 = dma.done [#allocation3], 32
    $region33: #{softmax_deeplift_forward.1} parent=1 // pred_fallthru
      _
    // Predicated region
    $region34: #{softmax_deeplift_forward.1} parent=1 // pred_check
      _
    $region35: #{softmax_deeplift_forward.1} parent=1 // pred_check_branch
      %72 = sbr.rel (0) target = $region37
    $region36: #{softmax_deeplift_forward.1} parent=1 // pred_region
      %73 = dma.done [#allocation6], 256
    $region37: #{softmax_deeplift_forward.1} parent=1 // pred_fallthru
      _
    // Predicated region
    $region38: #{softmax_deeplift_forward.1} parent=1 // pred_check
      _
    $region39: #{softmax_deeplift_forward.1} parent=1 // pred_check_branch
      %75 = sbr.rel (0) target = $region41
    $region40: #{softmax_deeplift_forward.1} parent=1 // pred_region
      %76 = dma.done [#allocation6], 1024
    $region41: #{softmax_deeplift_forward.1} parent=1 // pred_fallthru
      _
    // Predicated region
    $region42: #{softmax_deeplift_forward.1} parent=1 // pred_check
      _
    $region43: #{softmax_deeplift_forward.1} parent=1 // pred_check_branch
      %78 = sbr.rel (0) target = $region45
    $region44: #{softmax_deeplift_forward.1} parent=1 // pred_region
      %79 = dma.done [#allocation9], 1024
    $region45: #{softmax_deeplift_forward.1} parent=1 // pred_fallthru
      _
    %v81 = vld [vmem:[#allocation2] sm:$0x3]
    %v82 = vpack.c.bf16 %v81, %v81
    %v83 = vld [vmem:[#allocation5] sm:$0xf]
    %v84 = vld [vmem:[#allocation5 + $0x4] sm:$0xf]
    %v85 = vld [vmem:[#allocation5 + $0x8] sm:$0xf]
    %v86 = vld [vmem:[#allocation5 + $0xc] sm:$0xf]
    %v87 = vld [vmem:[%s2] sm:$0x1]
    %v89 = vlaneseq
    %v90 = vshrl.u32 %v89, 7
    %v91 = vsub.s32 0, %v90
    %v92 = vrot.slane %v87, %v91
    %v98 = vunpack.c.l.b16 %v83
    %v99 = vunpack.c.l.b16 %v84
    %v100 = vunpack.c.l.b16 %v85
    %v101 = vunpack.c.l.b16 %v86
    %v102 = vpack.c.b16 %v99, %v98
    %v103 = vpack.c.b16 %v101, %v100
    %vm106 = vcmask 261120
    %v108 = vsel %vm106, %v82, 0
    %110 = vmatprep.subr.bf16.mxu0 0
    %111 = vmatpush1.bf16.msra.mxu0 0
    %112 = vmatprep.subr.bf16.mxu0 0
    %113 = vmatpush1.bf16.msra.mxu0 0
    %114 = vmatprep.subr.bf16.mxu0 0
    %115 = vmatpush1.bf16.msra.mxu0 0
    %116 = vmatprep.subr.bf16.mxu0 0
    %117 = vmatpush1.bf16.msra.mxu0 0
    %118 = vmatprep.subr.bf16.mxu0 0
    %119 = vmatpush1.bf16.msra.mxu0 0
    %120 = vmatprep.subr.bf16.mxu0 0
    %121 = vmatpush1.bf16.msra.mxu0 0
    %122 = vmatprep.subr.bf16.mxu0 0
    %123 = vmatpush1.bf16.msra.mxu0 %v103
    %124 = vmatprep.subr.bf16.mxu0 0
    %125 = vmatpush1.bf16.msra.mxu0 %v102
    %126 = vmatprep.subr.bf16.mxu0 0
    %127 = vmatpush2.bf16.msra.mxu0 0
    %128 = vmatprep.subr.bf16.mxu0 0
    %129 = vmatpush2.bf16.msra.mxu0 0
    %130 = vmatprep.subr.bf16.mxu0 0
    %131 = vmatpush2.bf16.msra.mxu0 0
    %132 = vmatprep.subr.bf16.mxu0 0
    %133 = vmatpush2.bf16.msra.mxu0 0
    %134 = vmatprep.subr.bf16.mxu0 0
    %135 = vmatpush2.bf16.msra.mxu0 0
    %136 = vmatprep.subr.bf16.mxu0 0
    %137 = vmatpush2.bf16.msra.mxu0 0
    %138 = vmatprep.subr.bf16.mxu0 0
    %139 = vmatpush2.bf16.msra.mxu0 0
    %140 = vmatprep.subr.bf16.mxu0 0
    %141 = vmatpush2.bf16.msra.mxu0 0
    %142 = vmatprep.mubr.bf16.mxu0 0
    %143 = vmatmul.mubr.bf16.gmra.mxu0 %v108
    %v144 = vpop.f32.mrf.mxu0
    %v145 = vadd.f32 %v92, %v144
    %v146 = vpop.f32.mrf.mxu0
    %v147 = vpop.f32.mrf.mxu0
    %v148 = vpop.f32.mrf.mxu0
    %149 = vdwg.mxu0
    %v150 = vmax.f32 %v145, 0.0
    %v151 = vpack.c.bf16 %v150, %v150
    %v152 = vld [vmem:[#allocation7] sm:$0xf]
    %v153 = vld [vmem:[#allocation7 + $0x4] sm:$0xf]
    %v154 = vld [vmem:[#allocation7 + $0x8] sm:$0xf]
    %v155 = vld [vmem:[#allocation7 + $0xc] sm:$0xf]
    %v156 = vld [vmem:[#allocation7 + $0x10] sm:$0xf]
    %v157 = vld [vmem:[#allocation7 + $0x14] sm:$0xf]
    %v158 = vld [vmem:[#allocation7 + $0x18] sm:$0xf]
    %v159 = vld [vmem:[#allocation7 + $0x1c] sm:$0xf]
    %v160 = vld [vmem:[#allocation7 + $0x20] sm:$0xf]
    %v161 = vld [vmem:[#allocation7 + $0x24] sm:$0xf]
    %v162 = vld [vmem:[#allocation7 + $0x28] sm:$0xf]
    %v163 = vld [vmem:[#allocation7 + $0x2c] sm:$0xf]
    %v164 = vld [vmem:[#allocation7 + $0x30] sm:$0xf]
    %v165 = vld [vmem:[#allocation7 + $0x34] sm:$0xf]
    %v166 = vld [vmem:[#allocation7 + $0x38] sm:$0xf]
    %v167 = vld [vmem:[#allocation7 + $0x3c] sm:$0xf]
    %v168 = vld [vmem:[%s4] sm:$0x1]
    %v170 = vlaneseq
    %v171 = vshrl.u32 %v170, 7
    %v172 = vsub.s32 0, %v171
    %v173 = vrot.slane %v168, %v172
    %v191 = vunpack.c.l.b16 %v152
    %v192 = vunpack.c.l.b16 %v153
    %v193 = vunpack.c.l.b16 %v154
    %v194 = vunpack.c.l.b16 %v155
    %v195 = vunpack.c.l.b16 %v156
    %v196 = vunpack.c.l.b16 %v157
    %v197 = vunpack.c.l.b16 %v158
    %v198 = vunpack.c.l.b16 %v159
    %v199 = vunpack.c.l.b16 %v160
    %v200 = vunpack.c.l.b16 %v161
    %v201 = vunpack.c.l.b16 %v162
    %v202 = vunpack.c.l.b16 %v163
    %v203 = vunpack.c.l.b16 %v164
    %v204 = vunpack.c.l.b16 %v165
    %v205 = vunpack.c.l.b16 %v166
    %v206 = vunpack.c.l.b16 %v167
    %v207 = vpack.c.b16 %v192, %v191
    %v208 = vpack.c.b16 %v194, %v193
    %v209 = vpack.c.b16 %v196, %v195
    %v210 = vpack.c.b16 %v198, %v197
    %v211 = vpack.c.b16 %v200, %v199
    %v212 = vpack.c.b16 %v202, %v201
    %v213 = vpack.c.b16 %v204, %v203
    %v214 = vpack.c.b16 %v206, %v205
    %223 = vmatprep.subr.bf16.mxu0 0
    %224 = vmatpush1.bf16.msra.mxu0 %v214
    %225 = vmatprep.subr.bf16.mxu0 0
    %226 = vmatpush1.bf16.msra.mxu0 %v213
    %227 = vmatprep.subr.bf16.mxu0 0
    %228 = vmatpush1.bf16.msra.mxu0 %v212
    %229 = vmatprep.subr.bf16.mxu0 0
    %230 = vmatpush1.bf16.msra.mxu0 %v211
    %231 = vmatprep.subr.bf16.mxu0 0
    %232 = vmatpush1.bf16.msra.mxu0 %v210
    %233 = vmatprep.subr.bf16.mxu0 0
    %234 = vmatpush1.bf16.msra.mxu0 %v209
    %235 = vmatprep.subr.bf16.mxu0 0
    %236 = vmatpush1.bf16.msra.mxu0 %v208
    %237 = vmatprep.subr.bf16.mxu0 0
    %238 = vmatpush1.bf16.msra.mxu0 %v207
    %239 = vmatprep.subr.bf16.mxu0 0
    %240 = vmatpush2.bf16.msra.mxu0 0
    %241 = vmatprep.subr.bf16.mxu0 0
    %242 = vmatpush2.bf16.msra.mxu0 0
    %243 = vmatprep.subr.bf16.mxu0 0
    %244 = vmatpush2.bf16.msra.mxu0 0
    %245 = vmatprep.subr.bf16.mxu0 0
    %246 = vmatpush2.bf16.msra.mxu0 0
    %247 = vmatprep.subr.bf16.mxu0 0
    %248 = vmatpush2.bf16.msra.mxu0 0
    %249 = vmatprep.subr.bf16.mxu0 0
    %250 = vmatpush2.bf16.msra.mxu0 0
    %251 = vmatprep.subr.bf16.mxu0 0
    %252 = vmatpush2.bf16.msra.mxu0 0
    %253 = vmatprep.subr.bf16.mxu0 0
    %254 = vmatpush2.bf16.msra.mxu0 0
    %255 = vmatprep.mubr.bf16.mxu0 0
    %256 = vmatmul.mubr.bf16.gmra.mxu0 %v151
    %v257 = vpop.f32.mrf.mxu0
    %v258 = vadd.f32 %v173, %v257
    %v259 = vpop.f32.mrf.mxu0
    %v260 = vpop.f32.mrf.mxu0
    %v261 = vpop.f32.mrf.mxu0
    %262 = vdwg.mxu0
    %v263 = vmax.f32 %v258, 0.0
    %v264 = vpack.c.bf16 %v263, %v263
    %v265 = vld [vmem:[#allocation8] sm:$0xf]
    %v266 = vld [vmem:[#allocation8 + $0x4] sm:$0xf]
    %v267 = vld [vmem:[#allocation8 + $0x8] sm:$0xf]
    %v268 = vld [vmem:[#allocation8 + $0xc] sm:$0xf]
    %v269 = vld [vmem:[#allocation8 + $0x10] sm:$0xf]
    %v270 = vld [vmem:[#allocation8 + $0x14] sm:$0xf]
    %v271 = vld [vmem:[#allocation8 + $0x18] sm:$0xf]
    %v272 = vld [vmem:[#allocation8 + $0x1c] sm:$0xf]
    %v273 = vld [vmem:[#allocation8 + $0x20] sm:$0xf]
    %v274 = vld [vmem:[#allocation8 + $0x24] sm:$0xf]
    %v275 = vld [vmem:[#allocation8 + $0x28] sm:$0xf]
    %v276 = vld [vmem:[#allocation8 + $0x2c] sm:$0xf]
    %v277 = vld [vmem:[#allocation8 + $0x30] sm:$0xf]
    %v278 = vld [vmem:[#allocation8 + $0x34] sm:$0xf]
    %v279 = vld [vmem:[#allocation8 + $0x38] sm:$0xf]
    %v280 = vld [vmem:[#allocation8 + $0x3c] sm:$0xf]
    %v281 = vld [vmem:[%s6] sm:$0x1]
    %v283 = vlaneseq
    %v284 = vshrl.u32 %v283, 7
    %v285 = vsub.s32 0, %v284
    %v286 = vrot.slane %v281, %v285
    %v304 = vunpack.c.l.b16 %v265
    %v305 = vunpack.c.l.b16 %v266
    %v306 = vunpack.c.l.b16 %v267
    %v307 = vunpack.c.l.b16 %v268
    %v308 = vunpack.c.l.b16 %v269
    %v309 = vunpack.c.l.b16 %v270
    %v310 = vunpack.c.l.b16 %v271
    %v311 = vunpack.c.l.b16 %v272
    %v312 = vunpack.c.l.b16 %v273
    %v313 = vunpack.c.l.b16 %v274
    %v314 = vunpack.c.l.b16 %v275
    %v315 = vunpack.c.l.b16 %v276
    %v316 = vunpack.c.l.b16 %v277
    %v317 = vunpack.c.l.b16 %v278
    %v318 = vunpack.c.l.b16 %v279
    %v319 = vunpack.c.l.b16 %v280
    %v320 = vpack.c.b16 %v305, %v304
    %v321 = vpack.c.b16 %v307, %v306
    %v322 = vpack.c.b16 %v309, %v308
    %v323 = vpack.c.b16 %v311, %v310
    %v324 = vpack.c.b16 %v313, %v312
    %v325 = vpack.c.b16 %v315, %v314
    %v326 = vpack.c.b16 %v317, %v316
    %v327 = vpack.c.b16 %v319, %v318
    %336 = vmatprep.subr.bf16.mxu0 0
    %337 = vmatpush1.bf16.msra.mxu0 %v327
    %338 = vmatprep.subr.bf16.mxu0 0
    %339 = vmatpush1.bf16.msra.mxu0 %v326
    %340 = vmatprep.subr.bf16.mxu0 0
    %341 = vmatpush1.bf16.msra.mxu0 %v325
    %342 = vmatprep.subr.bf16.mxu0 0
    %343 = vmatpush1.bf16.msra.mxu0 %v324
    %344 = vmatprep.subr.bf16.mxu0 0
    %345 = vmatpush1.bf16.msra.mxu0 %v323
    %346 = vmatprep.subr.bf16.mxu0 0
    %347 = vmatpush1.bf16.msra.mxu0 %v322
    %348 = vmatprep.subr.bf16.mxu0 0
    %349 = vmatpush1.bf16.msra.mxu0 %v321
    %350 = vmatprep.subr.bf16.mxu0 0
    %351 = vmatpush1.bf16.msra.mxu0 %v320
    %352 = vmatprep.subr.bf16.mxu0 0
    %353 = vmatpush2.bf16.msra.mxu0 0
    %354 = vmatprep.subr.bf16.mxu0 0
    %355 = vmatpush2.bf16.msra.mxu0 0
    %356 = vmatprep.subr.bf16.mxu0 0
    %357 = vmatpush2.bf16.msra.mxu0 0
    %358 = vmatprep.subr.bf16.mxu0 0
    %359 = vmatpush2.bf16.msra.mxu0 0
    %360 = vmatprep.subr.bf16.mxu0 0
    %361 = vmatpush2.bf16.msra.mxu0 0
    %362 = vmatprep.subr.bf16.mxu0 0
    %363 = vmatpush2.bf16.msra.mxu0 0
    %364 = vmatprep.subr.bf16.mxu0 0
    %365 = vmatpush2.bf16.msra.mxu0 0
    %366 = vmatprep.subr.bf16.mxu0 0
    %367 = vmatpush2.bf16.msra.mxu0 0
    %368 = vmatprep.mubr.bf16.mxu0 0
    %369 = vmatmul.mubr.bf16.gmra.mxu0 %v264
    %v370 = vpop.f32.mrf.mxu0
    %v371 = vadd.f32 %v286, %v370
    %v372 = vpop.f32.mrf.mxu0
    %v373 = vpop.f32.mrf.mxu0
    %v374 = vpop.f32.mrf.mxu0
    %375 = vdwg.mxu0
    %vm376 = vcmask 1041408
    %v377 = vsel %vm376, %v371, -inf
    %378 = vmax.xlane.f32.xlu0 %v377
    %v379 = vpop.xlane.xlu0 %378
    %v380 = vsub.f32 %v371, %v379
    %v381 = vmul.f32 %v380, 1.442695
    %v382 = vpow.pop %v381
    %v383 = vsel %vm376, %v382, 0.0
    %384 = vadd.xlane.f32.xlu0 %v383
    %v385 = vpop.xlane.xlu0 %384
    %v386 = vrcp.pop %v385
    %v387 = vmul.f32 %v382, %v386
    %vm388 = vcmask 58368
    %389 = vst.msk [vmem:[#allocation10] sm:$0x3] %vm388, %v387
    // Predicated region
    $region46: #{softmax_deeplift_forward.1} parent=1 // pred_check
      _
    $region47: #{softmax_deeplift_forward.1} parent=1 // pred_check_branch
      %391 = sbr.rel (0) target = $region49
    $region48: #{softmax_deeplift_forward.1} parent=1 // pred_region
      %s393 = ssub.s32 32, 32
      %394 = vsyncadd [#allocation4], %s393
      %s396 = sshll.u32 [#allocation10], 4
      %s397 = int_to_ptr.vmem [resolvable:$true] %s396
      %399 = dma.vmem_to_hbm [thread:$0]  %s397, 32, %s7, [#allocation4]
    $region49: #{softmax_deeplift_forward.1} parent=1 // pred_fallthru
      _
    // Predicated region
    $region50: #{softmax_deeplift_forward.1} parent=1 // pred_check
      _
    $region51: #{softmax_deeplift_forward.1} parent=1 // pred_check_branch
      %401 = sbr.rel (0) target = $region53
    $region52: #{softmax_deeplift_forward.1} parent=1 // pred_region
      %402 = dma.done [#allocation4], 32
    $region53: #{softmax_deeplift_forward.1} parent=1 // pred_fallthru
      _
    %403 = vsyncpa [#allocation3], 1
    %404 = vsyncpa [#allocation6], 1
    %405 = vsyncpa [#allocation9], 1
    %406 = vsyncpa [#allocation4], 1

</llo_original>
